<compile_context>
chip_gen: v7x
topology: tpu7x:2x2x1
jax: 0.10.0
libtpu: 0.0.40
codegen_flags: <defaults>
</compile_context>

<pallas_src>
import math

import jax
import jax.numpy as jnp
from jax.experimental import pallas as pl
from jax.experimental.pallas import tpu as pltpu


def _cdiv(a, b):
    return -(-a // b)


def _round_up(x, m):
    return _cdiv(x, m) * m


def _lcm(a, b):
    return a * b // math.gcd(a, b)


def _sublane(itemsize):
    return {4: 8, 2: 16, 1: 32}.get(itemsize, 8)


def _pad2(rows, cols, itemsize):
    """Bytes of a (rows, cols) VMEM block after (sublane, 128-lane) padding."""
    return (_round_up(max(rows, 1), _sublane(itemsize))
            * _round_up(max(cols, 1), 128) * itemsize)


def _vmem_limits():
    """(tile_budget_bytes, vmem_limit_bytes), generation-aware."""
    phys = None
    try:
        phys = getattr(pltpu.get_tpu_info(), "vmem_capacity_bytes", None)
    except Exception:
        phys = None
    if not phys or phys <= 0:
        phys = 64 * 1024 * 1024          # conservative: v7x has 64 MiB per TC
    limit = min(int(phys) * 5 // 8, 96 * 1024 * 1024)   # 64MiB->40, 128MiB->80
    budget = limit * 3 // 4              # headroom for compiler-internal scratch
    return budget, limit


def _choose_c_tile(C, I, O):
    """Channel-tile size: lane-aligned blocks, bounded MXU amplification."""
    # When c_tile < C, both c_tile*I and c_tile*O must be multiples of 128
    # (lane-dense BlockSpec constraint on folded axes).
    c_lane = _lcm(128 // math.gcd(I, 128), 128 // math.gcd(O, 128))
    # The block-diagonal matmul does c_tile x the minimal FLOPs; keep
    # K = c_tile*I around one MXU pass so the kernel stays HBM-bound.
    cap = max(1, 128 // I)
    cap = max(cap, c_lane)
    if C <= cap:
        return C
    best = (cap // c_lane) * c_lane
    for m in range(best, 0, -c_lane):     # prefer divisors of C (no masking)
        if C % m == 0:
            return m
    return best


def _choose_b_tile(B, C, c_tile, I, O, x_it, w_it, out_it, has_bias, budget):
    """Largest lane-legal b_tile whose padded, double-buffered blocks fit."""
    def block_bytes(bt):
        xb = _pad2(bt, c_tile * I, x_it)
        wb = c_tile * _pad2(I, O, w_it)
        bb = _pad2(1, c_tile * O, 4) if has_bias else 0
        ob = _pad2(bt, c_tile * O, out_it)
        wbd = _pad2(c_tile * I, c_tile * O, w_it)       # scratch (single buffer)
        acc = _pad2(bt, c_tile * O, 4)                  # in-kernel f32 temporary
        return 2 * (xb + wb + bb + ob) + wbd + acc      # 2x: double buffering

    cands = ([B] if B <= 2048 else []) + \
        [v for v in (2048, 1024, 512, 256, 128, 64, 32, 16, 8) if v < B]
    if not cands:
        cands = [B]
    b_tile = cands[-1]
    for bt in cands:
        if block_bytes(bt) <= budget:
            b_tile = bt
            break
    # Guarantee >= 2 grid steps (pipeline depth / megacore) when B allows it.
    if _cdiv(C, c_tile) * _cdiv(B, b_tile) == 1 and B >= 16:
        target = 4 if B >= 64 else 2
        b_tile = min(b_tile, _round_up(_cdiv(B, target), 8))
    return b_tile


def _make_kernel(C, c_tile, I, O, has_bias, mask_channels):
    def kernel(*refs):
        if has_bias:
            x_ref, w_ref, b_ref, o_ref, wbd_ref = refs
        else:
            x_ref, w_ref, o_ref, wbd_ref = refs
            b_ref = None

        # Build the (c_tile*I, c_tile*O) block-diagonal weight once per
        # channel tile; it is invariant along the inner B grid axis.
        @pl.when(pl.program_id(1) == 0)
        def _build():
            wbd_ref[...] = jnp.zeros_like(wbd_ref)
            for c in range(c_tile):
                wbd_ref[pl.ds(c * I, I), pl.ds(c * O, O)] = (
                    w_ref[c].astype(wbd_ref.dtype))

        x = x_ref[...]
        if mask_channels:
            # Last channel tile is partial: zero the lanes of padded channels
            # so garbage (possibly inf/nan) in the out-of-bounds part of the
            # x block cannot reach valid output lanes via inf*0 in the matmul.
            valid = (C - pl.program_id(0) * c_tile) * I
            lane = jax.lax.broadcasted_iota(jnp.int32, x.shape, 1)
            x = jnp.where(lane < valid, x, jnp.zeros_like(x))

        acc = jnp.dot(x, wbd_ref[...], preferred_element_type=jnp.float32)
        if has_bias:
            acc = acc + b_ref[...].astype(jnp.float32)
        o_ref[...] = acc.astype(o_ref.dtype)

    return kernel


def stacked_linear(x, weight, bias=None, *, b_tile=None, c_tile=None):
    """Pallas forward of StackedLinearLayer.

    x: (B, C, I), weight: (C, I, O), bias: (C, O) or None -> (B, C, O).
    """
    B, C, I = x.shape
    Cw, Iw, O = weight.shape
    if (Cw, Iw) != (C, I):
        raise ValueError(f"weight shape {weight.shape} incompatible with {x.shape}")
    has_bias = bias is not None
    if has_bias and bias.shape != (C, O):
        raise ValueError(f"bias shape {bias.shape} != {(C, O)}")
    out_dtype = x.dtype

    budget, vmem_limit = _vmem_limits()
    x_it = x.dtype.itemsize
    w_it = weight.dtype.itemsize
    out_it = jnp.dtype(out_dtype).itemsize

    if c_tile is None:
        c_tile = _choose_c_tile(C, I, O)
    c_tile = min(c_tile, C)
    if not (c_tile == C or ((c_tile * I) % 128 == 0 and (c_tile * O) % 128 == 0)):
        raise ValueError("c_tile must equal C or make c_tile*I and c_tile*O "
                         "multiples of 128 (lane-dense blocks)")
    if b_tile is None:
        b_tile = _choose_b_tile(B, C, c_tile, I, O, x_it, w_it, out_it,
                                has_bias, budget)
    b_tile = min(b_tile, B)
    if not (b_tile == B or b_tile % 8 == 0):
        raise ValueError("b_tile must equal B or be a multiple of 8")

    mask_channels = (C % c_tile) != 0
    grid = (_cdiv(C, c_tile), _cdiv(B, b_tile))   # B innermost: weight resident

    # Lane-dense layouts (free contiguous minor-dim merges).
    x2d = x.reshape(B, C * I)
    operands = [x2d, weight]
    in_specs = [
        pl.BlockSpec((b_tile, c_tile * I), lambda c, b: (b, c)),    # x (folded)
        pl.BlockSpec((c_tile, I, O), lambda c, b: (c, 0, 0)),       # weight
    ]
    if has_bias:
        operands.append(bias.reshape(1, C * O))
        in_specs.append(pl.BlockSpec((1, c_tile * O), lambda c, b: (0, c)))

    out_spec = pl.BlockSpec((b_tile, c_tile * O), lambda c, b: (b, c))
    out_shape = jax.ShapeDtypeStruct((B, C * O), out_dtype)

    kernel = _make_kernel(C, c_tile, I, O, has_bias, mask_channels)

    bytes_accessed = (x.size * x_it + weight.size * w_it
                      + (bias.size * bias.dtype.itemsize if has_bias else 0)
                      + B * C * O * out_it)
    cost = pl.CostEstimate(flops=2 * B * C * I * O, transcendentals=0,
                           bytes_accessed=bytes_accessed)

    out2d = pl.pallas_call(
        kernel,
        out_shape=out_shape,
        grid_spec=pltpu.PrefetchScalarGridSpec(
            num_scalar_prefetch=0,
            grid=grid,
            in_specs=in_specs,
            out_specs=out_spec,
            scratch_shapes=[pltpu.VMEM((c_tile * I, c_tile * O), weight.dtype)],
        ),
        compiler_params=pltpu.CompilerParams(
            # Channel axis may be sharded across TensorCores (v7x); the B axis
            # stays "arbitrary" so every core sees b==0 first for each of its
            # channel tiles (that is where the W_bd scratch is rebuilt).
            dimension_semantics=("parallel", "arbitrary"),
            vmem_limit_bytes=vmem_limit,
        ),
        cost_estimate=cost,
    )(*operands)

    return out2d.reshape(B, C, O)   # contiguous minor-dim split: free


def init_params(key, n_channels, in_features, out_features, dtype=jnp.float32):
    """Matches StackedLinearLayer.reset_parameters: U(-1/sqrt(fan_in), +...)."""
    bound = 1.0 / math.sqrt(in_features)
    kw, kb = jax.random.split(key)
    weight = jax.random.uniform(
        kw, (n_channels, in_features, out_features), dtype=dtype,
        minval=-bound, maxval=bound)
    bias = jax.random.uniform(
        kb, (n_channels, out_features), dtype=dtype,
        minval=-bound, maxval=bound)
    return weight, bias


def _reference(x, weight, bias):
    out = jnp.einsum('bci,cio->bco', x, weight,
                     precision=jax.lax.Precision.HIGHEST)
    if bias is not None:
        out = out + bias[None, :, :]
    return out


if __name__ == "__main__":
    key = jax.random.PRNGKey(0)

    def run_case(B, C, I, O, key, *, use_bias=True, dtype=jnp.float32,
                 atol=1e-4, rtol=1e-4, **kwargs):
        kx, kp, key = jax.random.split(key, 3)
        x = jax.random.normal(kx, (B, C, I), dtype=jnp.float32).astype(dtype)
        weight, bias = init_params(kp, C, I, O, dtype=dtype)
        bias = bias if use_bias else None
        out = jax.block_until_ready(stacked_linear(x, weight, bias, **kwargs))
        ref = _reference(x.astype(jnp.float32), weight.astype(jnp.float32),
                         None if bias is None else bias.astype(jnp.float32))
        assert out.shape == (B, C, O), out.shape
        assert out.dtype == x.dtype, out.dtype
        ok = jnp.allclose(out.astype(jnp.float32), ref, atol=atol, rtol=rtol)
        assert bool(ok), (f"mismatch for shape {(B, C, I, O)} dtype={dtype} "
                          f"bias={use_bias} kwargs={kwargs}")
        return key

    # Small shape consistent with the module (batch=2, n_channels=4,
    # in_features=16, out_features=32): single-step, lane-dense folded layout.
    key = run_case(2, 4, 16, 32, key)
    # out_features a multiple of 128 (still the folded lane-dense layout).
    key = run_case(4, 4, 16, 128, key)
    # Partial tiles on both axes: C % c_tile != 0 (in-kernel channel-lane
    # masking) and B % b_tile != 0 (OOB rows masked at writeback); multi-step
    # grid exercising the resident block-diagonal weight scratch.
    key = run_case(20, 12, 16, 32, key, b_tile=16, c_tile=8)
    # No-bias variant (bias input dropped entirely).
    key = run_case(2, 4, 16, 32, key, use_bias=False)
    # Native bf16 inputs (no wrapper casts); f32 MXU accumulation in-kernel.
    key = run_case(8, 4, 16, 32, key, dtype=jnp.bfloat16, atol=3e-2, rtol=3e-2)

    print("KERNEL_OK")
</pallas_src>

<mosaic_0001>
module attributes {stable_mosaic.version = 11 : i64} {
  func.func @kernel(%arg0: i32, %arg1: i32, %arg2: memref<2x64xf32, #tpu.memory_space<vmem>>, %arg3: memref<4x16x32xf32, #tpu.memory_space<vmem>>, %arg4: memref<1x128xf32, #tpu.memory_space<vmem>>, %arg5: memref<2x128xf32, #tpu.memory_space<vmem>>, %arg6: memref<64x128xf32, #tpu.memory_space<vmem>>) attributes {dimension_semantics = [#tpu.dimension_semantics<parallel>, #tpu.dimension_semantics<arbitrary>], iteration_bounds = array<i64: 1, 1>, scalar_prefetch = 0 : i64, scratch_operands = 1 : i64, tpu.core_type = #tpu.core_type<tc>, window_params = [{transform_indices = @transform_0, window_bounds = array<i64: 2, 64>}, {transform_indices = @transform_1, window_bounds = array<i64: 4, 16, 32>}, {transform_indices = @transform_2, window_bounds = array<i64: 1, 128>}, {transform_indices = @transform_3, window_bounds = array<i64: 2, 128>}]} {
    %c0_i32 = arith.constant 0 : i32
    %0 = arith.cmpi eq, %arg1, %c0_i32 : i32
    %1 = arith.extui %0 : i1 to i32
    %c0_i32_0 = arith.constant 0 : i32
    %2 = arith.cmpi ne, %1, %c0_i32_0 : i32
    scf.if %2 {
      %cst_8 = arith.constant 0.000000e+00 : f32
      %10 = vector.broadcast %cst_8 : f32 to vector<64x128xf32>
      %c0_9 = arith.constant 0 : index
      %c0_10 = arith.constant 0 : index
      %11 = vector.load %arg6[%c0_9, %c0_10] : memref<64x128xf32, #tpu.memory_space<vmem>>, vector<64x128xf32>
      tpu.vector_store %arg6[%c0_9, %c0_10], %10 {strides = array<i32>} : memref<64x128xf32, #tpu.memory_space<vmem>>, vector<64x128xf32>,
      %c0_11 = arith.constant 0 : index
      %c0_12 = arith.constant 0 : index
      %c0_13 = arith.constant 0 : index
      %12 = vector.load %arg3[%c0_11, %c0_12, %c0_13] : memref<4x16x32xf32, #tpu.memory_space<vmem>>, vector<1x16x32xf32>
      %13 = vector.shape_cast %12 : vector<1x16x32xf32> to vector<16x32xf32>
      %c0_14 = arith.constant 0 : index
      %c0_15 = arith.constant 0 : index
      %14 = vector.load %arg6[%c0_14, %c0_15] : memref<64x128xf32, #tpu.memory_space<vmem>>, vector<16x32xf32>
      tpu.vector_store %arg6[%c0_14, %c0_15], %13 {strides = array<i32>} : memref<64x128xf32, #tpu.memory_space<vmem>>, vector<16x32xf32>,
      %c1 = arith.constant 1 : index
      %c0_16 = arith.constant 0 : index
      %c0_17 = arith.constant 0 : index
      %15 = vector.load %arg3[%c1, %c0_16, %c0_17] : memref<4x16x32xf32, #tpu.memory_space<vmem>>, vector<1x16x32xf32>
      %16 = vector.shape_cast %15 : vector<1x16x32xf32> to vector<16x32xf32>
      %c16 = arith.constant 16 : index
      %c32 = arith.constant 32 : index
      %17 = vector.load %arg6[%c16, %c32] : memref<64x128xf32, #tpu.memory_space<vmem>>, vector<16x32xf32>
      tpu.vector_store %arg6[%c16, %c32], %16 {strides = array<i32>} : memref<64x128xf32, #tpu.memory_space<vmem>>, vector<16x32xf32>,
      %c2 = arith.constant 2 : index
      %c0_18 = arith.constant 0 : index
      %c0_19 = arith.constant 0 : index
      %18 = vector.load %arg3[%c2, %c0_18, %c0_19] : memref<4x16x32xf32, #tpu.memory_space<vmem>>, vector<1x16x32xf32>
      %19 = vector.shape_cast %18 : vector<1x16x32xf32> to vector<16x32xf32>
      %c32_20 = arith.constant 32 : index
      %c64 = arith.constant 64 : index
      %20 = vector.load %arg6[%c32_20, %c64] : memref<64x128xf32, #tpu.memory_space<vmem>>, vector<16x32xf32>
      tpu.vector_store %arg6[%c32_20, %c64], %19 {strides = array<i32>} : memref<64x128xf32, #tpu.memory_space<vmem>>, vector<16x32xf32>,
      %c3 = arith.constant 3 : index
      %c0_21 = arith.constant 0 : index
      %c0_22 = arith.constant 0 : index
      %21 = vector.load %arg3[%c3, %c0_21, %c0_22] : memref<4x16x32xf32, #tpu.memory_space<vmem>>, vector<1x16x32xf32>
      %22 = vector.shape_cast %21 : vector<1x16x32xf32> to vector<16x32xf32>
      %c48 = arith.constant 48 : index
      %c96 = arith.constant 96 : index
      %23 = vector.load %arg6[%c48, %c96] : memref<64x128xf32, #tpu.memory_space<vmem>>, vector<16x32xf32>
      tpu.vector_store %arg6[%c48, %c96], %22 {strides = array<i32>} : memref<64x128xf32, #tpu.memory_space<vmem>>, vector<16x32xf32>,
    } else {
    }
    %c0 = arith.constant 0 : index
    %c0_1 = arith.constant 0 : index
    %3 = vector.load %arg2[%c0, %c0_1] : memref<2x64xf32, #tpu.memory_space<vmem>>, vector<2x64xf32>
    %c0_2 = arith.constant 0 : index
    %c0_3 = arith.constant 0 : index
    %4 = vector.load %arg6[%c0_2, %c0_3] : memref<64x128xf32, #tpu.memory_space<vmem>>, vector<64x128xf32>
    %cst = arith.constant dense<0.000000e+00> : vector<2x128xf32>
    %5 = tpu.matmul %3, %4, %cst {dimension_numbers = #tpu.dot_dimension_numbers<[1], [0], [0], [1], [0, 0, 1, 1], [], []>} : vector<2x64xf32>, vector<64x128xf32>, vector<2x128xf32> -> vector<2x128xf32>
    %c0_4 = arith.constant 0 : index
    %c0_5 = arith.constant 0 : index
    %6 = vector.load %arg4[%c0_4, %c0_5] : memref<1x128xf32, #tpu.memory_space<vmem>>, vector<1x128xf32>
    %7 = vector.broadcast %6 : vector<1x128xf32> to vector<2x128xf32>
    %8 = arith.addf %5, %7 : vector<2x128xf32>
    %c0_6 = arith.constant 0 : index
    %c0_7 = arith.constant 0 : index
    %9 = vector.load %arg5[%c0_6, %c0_7] : memref<2x128xf32, #tpu.memory_space<vmem>>, vector<2x128xf32>
    tpu.vector_store %arg5[%c0_6, %c0_7], %8 {strides = array<i32>} : memref<2x128xf32, #tpu.memory_space<vmem>>, vector<2x128xf32>,
    return
  }
  func.func @transform_0(%arg0: i32, %arg1: i32) -> (i32, i32) {
    %c0_i32 = arith.constant 0 : i32
    return %arg1, %arg0 : i32, i32
  }
  func.func @transform_1(%arg0: i32, %arg1: i32) -> (i32, i32, i32) {
    %c0_i32 = arith.constant 0 : i32
    %c0_i32_0 = arith.constant 0 : i32
    %c0_i32_1 = arith.constant 0 : i32
    return %arg0, %c0_i32, %c0_i32_0 : i32, i32, i32
  }
  func.func @transform_2(%arg0: i32, %arg1: i32) -> (i32, i32) {
    %c0_i32 = arith.constant 0 : i32
    %c0_i32_0 = arith.constant 0 : i32
    return %c0_i32, %arg0 : i32, i32
  }
  func.func @transform_3(%arg0: i32, %arg1: i32) -> (i32, i32) {
    %c0_i32 = arith.constant 0 : i32
    return %arg1, %arg0 : i32, i32
  }
}

</mosaic_0001>

<llo_original>
// kernel: tpu_custom_call.1
$region0: #{tpu_custom_call.1}
  #allocation0 [shape = 'u32[]', space=smem, size = 0x4, offset = 0x4, fixed_abs, tag = 'smem constant byte address 0x4 - core index']
  #allocation1 [shape = 'u32[144,128]{1,0:T(1,128)}', space=vmem, size = 0x12000, scoped, tag = 'internal scratch']
  #allocation2 [shape = 'f32[64,128]{1,0:T(8,128)}', space=vmem, size = 0x8000, scoped, tag = 'scratch operand']
  %s0 = inlined_call_operand.hbm [shape: f32[2,64], index: 0, kind: input, shape index: {}]
  %s1 = inlined_call_operand.hbm [shape: f32[4,16,32], index: 1, kind: input, shape index: {}]
  %s2 = inlined_call_operand.vmem [shape: f32[1,128], index: 2, kind: input, shape index: {}]
  %s3 = inlined_call_operand.hbm [shape: f32[2,128], index: 3, kind: output, shape index: {}]
  %s4 = sld [smem:[#allocation0]]
  $region34: #{tpu_custom_call.1} parent=0
    _
  %s6 = ssub.s32 1, %s4
  %s7 = scalar_select 0, %s6, %s4
  $region1: #{tpu_custom_call.1} parent=0
    #allocation3 [shape = 'u8[1024]{0}', space=vmem, size = 0x400, scoped, tag = 'input window, operand 0, single buffered']
    #allocation4 [shape = 's32[1]{0}', space=sflag, size = 0x4, scoped, tag = 'scoped memory for tpu_custom_call.1']
    #allocation5 [shape = 's32[1]{0}', space=sflag, size = 0x4, scoped, tag = 'scoped memory for tpu_custom_call.1']
    #allocation6 [shape = 'u8[32768]{0}', space=vmem, size = 0x8000, scoped, tag = 'input window, operand 1, single buffered']
    #allocation7 [shape = 's32[1]{0}', space=sflag, size = 0x4, scoped, tag = 'scoped memory for tpu_custom_call.1']
    #allocation8 [shape = 'u8[1024]{0}', space=vmem, size = 0x400, scoped, tag = 'output window, operand 0, single buffered']
    %8 = vsyncpa [#allocation4], 0
    %9 = vsyncpa [#allocation7], 0
    %10 = vsyncpa [#allocation5], 0
    // Predicated region
    $region2: #{tpu_custom_call.1} parent=1 // pred_check
      _
    $region3: #{tpu_custom_call.1} parent=1 // pred_check_branch
      %12 = sbr.rel (0) target = $region5
    $region4: #{tpu_custom_call.1} parent=1 // pred_region
      %s14 = ssub.s32 32, 32
      %15 = vsyncadd [#allocation4], %s14
      %s17 = sshll.u32 [#allocation3], 4
      %s18 = int_to_ptr.vmem [resolvable:$true] %s17
      %20 = dma.hbm_to_vmem [thread:$0]  %s0, 32, %s18, [#allocation4]
    $region5: #{tpu_custom_call.1} parent=1 // pred_fallthru
      _
    // Predicated region
    $region6: #{tpu_custom_call.1} parent=1 // pred_check
      _
    $region7: #{tpu_custom_call.1} parent=1 // pred_check_branch
      %22 = sbr.rel (0) target = $region9
    $region8: #{tpu_custom_call.1} parent=1 // pred_region
      %s24 = ssub.s32 1024, 1024
      %25 = vsyncadd [#allocation7], %s24
      %s26 = sshll.u32 [#allocation6], 4
      %s27 = int_to_ptr.vmem [resolvable:$true] %s26
      %32 = dma.hbm_to_vmem [thread:$0]  %s1, 1024, %s27, [#allocation7], 128, 128, 8
    $region9: #{tpu_custom_call.1} parent=1 // pred_fallthru
      _
    // Predicated region
    $region10: #{tpu_custom_call.1} parent=1 // pred_check
      _
    $region11: #{tpu_custom_call.1} parent=1 // pred_check_branch
      %34 = sbr.rel (0) target = $region13
    $region12: #{tpu_custom_call.1} parent=1 // pred_region
      _
    $region13: #{tpu_custom_call.1} parent=1 // pred_fallthru
      _
    // Predicated region
    $region14: #{tpu_custom_call.1} parent=1 // pred_check
      _
    $region15: #{tpu_custom_call.1} parent=1 // pred_check_branch
      %36 = sbr.rel (0) target = $region17
    $region16: #{tpu_custom_call.1} parent=1 // pred_region
      %37 = dma.done [#allocation4], 32
    $region17: #{tpu_custom_call.1} parent=1 // pred_fallthru
      _
    // Predicated region
    $region18: #{tpu_custom_call.1} parent=1 // pred_check
      _
    $region19: #{tpu_custom_call.1} parent=1 // pred_check_branch
      %39 = sbr.rel (0) target = $region21
    $region20: #{tpu_custom_call.1} parent=1 // pred_region
      %40 = dma.done [#allocation7], 1024
    $region21: #{tpu_custom_call.1} parent=1 // pred_fallthru
      _
    %p41 = scmp.eq.s32.totalorder 0, 0
    // Predicated region
    $region22: #{tpu_custom_call.1} parent=1 // pred_check
      %p42 = pneg %p41
    $region23: #{tpu_custom_call.1} parent=1 // pred_check_branch
      %44 = sbr.rel (%p42) target = $region25
    $region24: #{tpu_custom_call.1} parent=1 // pred_region
      %45 = vst [vmem:[#allocation2] sm:$0xff] 0.0
      %46 = vst [vmem:[#allocation2 + $0x8] sm:$0xff] 0.0
      %47 = vst [vmem:[#allocation2 + $0x10] sm:$0xff] 0.0
      %48 = vst [vmem:[#allocation2 + $0x18] sm:$0xff] 0.0
      %49 = vst [vmem:[#allocation2 + $0x20] sm:$0xff] 0.0
      %50 = vst [vmem:[#allocation2 + $0x28] sm:$0xff] 0.0
      %51 = vst [vmem:[#allocation2 + $0x30] sm:$0xff] 0.0
      %52 = vst [vmem:[#allocation2 + $0x38] sm:$0xff] 0.0
      %v53 = vld [vmem:[#allocation6] sm:$0xff]
      %v54 = vld [vmem:[#allocation6 + $0x8] sm:$0xff]
      %vm55 = vcmask 261120
      %56 = vst.msk [vmem:[#allocation2] sm:$0xff] %vm55, %v53
      %57 = vst.msk [vmem:[#allocation2 + $0x8] sm:$0xff] %vm55, %v54
      %s58 = scalar_lea.vmem [#allocation6], 16
      %v59 = vld [vmem:[%s58] sm:$0xff]
      %v60 = vld [vmem:[%s58 + $0x8] sm:$0xff]
      %63 = vrot.lane.b32.xlu0 %v59, 32
      %v64 = vpop.permute.xlu0 %63
      %65 = vrot.lane.b32.xlu0 %v60, 32
      %v66 = vpop.permute.xlu0 %65
      %vm69 = vcmask 523520
      %70 = vst.msk [vmem:[#allocation2 + $0x10] sm:$0xff] %vm69, %v64
      %71 = vst.msk [vmem:[#allocation2 + $0x18] sm:$0xff] %vm69, %v66
      %s72 = scalar_lea.vmem [#allocation6], 32
      %v73 = vld [vmem:[%s72] sm:$0xff]
      %v74 = vld [vmem:[%s72 + $0x8] sm:$0xff]
      %77 = vrot.lane.b32.xlu0 %v73, 64
      %v78 = vpop.permute.xlu0 %77
      %79 = vrot.lane.b32.xlu0 %v74, 64
      %v80 = vpop.permute.xlu0 %79
      %vm83 = vcmask 785920
      %84 = vst.msk [vmem:[#allocation2 + $0x20] sm:$0xff] %vm83, %v78
      %85 = vst.msk [vmem:[#allocation2 + $0x28] sm:$0xff] %vm83, %v80
      %s86 = scalar_lea.vmem [#allocation6], 48
      %v87 = vld [vmem:[%s86] sm:$0xff]
      %v88 = vld [vmem:[%s86 + $0x8] sm:$0xff]
      %91 = vrot.lane.b32.xlu0 %v87, 96
      %v92 = vpop.permute.xlu0 %91
      %93 = vrot.lane.b32.xlu0 %v88, 96
      %v94 = vpop.permute.xlu0 %93
      %vm97 = vcmask 1048320
      %98 = vst.msk [vmem:[#allocation2 + $0x30] sm:$0xff] %vm97, %v92
      %99 = vst.msk [vmem:[#allocation2 + $0x38] sm:$0xff] %vm97, %v94
    $region25: #{tpu_custom_call.1} parent=1 // pred_fallthru
      _
    %v100 = vld [vmem:[#allocation3] sm:$0x3]
    %v101 = vld [vmem:[#allocation2] sm:$0xff]
    %v102 = vld [vmem:[#allocation2 + $0x8] sm:$0xff]
    %v103 = vld [vmem:[#allocation2 + $0x10] sm:$0xff]
    %v104 = vld [vmem:[#allocation2 + $0x18] sm:$0xff]
    %v105 = vld [vmem:[#allocation2 + $0x20] sm:$0xff]
    %v106 = vld [vmem:[#allocation2 + $0x28] sm:$0xff]
    %v107 = vld [vmem:[#allocation2 + $0x30] sm:$0xff]
    %v108 = vld [vmem:[#allocation2 + $0x38] sm:$0xff]
    %v109 = vld [vmem:[%s2] sm:$0x1]
    %v111 = vlaneseq
    %v112 = vshrl.u32 %v111, 7
    %v113 = vsub.s32 0, %v112
    %v114 = vrot.slane %v109, %v113
    %vm116 = vcmask 523264
    %v118 = vsel %vm116, %v100, 0
    %120 = vmatprep.subr.mxu0 0.0
    %121 = vmatpush1.msra.mxu0 %v101
    %122 = vmatprep.subr.mxu0 0.0
    %123 = vmatpush1.msra.mxu0 %v102
    %124 = vmatprep.subr.mxu0 0.0
    %125 = vmatpush1.msra.mxu0 %v103
    %126 = vmatprep.subr.mxu0 0.0
    %127 = vmatpush1.msra.mxu0 %v104
    %128 = vmatprep.subr.mxu0 0.0
    %129 = vmatpush1.msra.mxu0 %v105
    %130 = vmatprep.subr.mxu0 0.0
    %131 = vmatpush1.msra.mxu0 %v106
    %132 = vmatprep.subr.mxu0 0.0
    %133 = vmatpush1.msra.mxu0 %v107
    %134 = vmatprep.subr.mxu0 0.0
    %135 = vmatpush1.msra.mxu0 %v108
    %136 = vmatprep.subr.mxu0 0.0
    %137 = vmatpush1.msra.mxu0 0.0
    %138 = vmatprep.subr.mxu0 0.0
    %139 = vmatpush1.msra.mxu0 0.0
    %140 = vmatprep.subr.mxu0 0.0
    %141 = vmatpush1.msra.mxu0 0.0
    %142 = vmatprep.subr.mxu0 0.0
    %143 = vmatpush1.msra.mxu0 0.0
    %144 = vmatprep.subr.mxu0 0.0
    %145 = vmatpush1.msra.mxu0 0.0
    %146 = vmatprep.subr.mxu0 0.0
    %147 = vmatpush1.msra.mxu0 0.0
    %148 = vmatprep.subr.mxu0 0.0
    %149 = vmatpush1.msra.mxu0 0.0
    %150 = vmatprep.subr.mxu0 0.0
    %151 = vmatpush1.msra.mxu0 0.0
    %152 = vmatprep.subr.mxu0 0.0
    %153 = vmatpush1.msra.mxu0 0.0
    %154 = vmatprep.subr.mxu0 0.0
    %155 = vmatpush1.msra.mxu0 0.0
    %156 = vmatprep.subr.mxu0 0.0
    %157 = vmatpush1.msra.mxu0 0.0
    %158 = vmatprep.subr.mxu0 0.0
    %159 = vmatpush1.msra.mxu0 0.0
    %160 = vmatprep.subr.mxu0 0.0
    %161 = vmatpush1.msra.mxu0 0.0
    %162 = vmatprep.subr.mxu0 0.0
    %163 = vmatpush1.msra.mxu0 0.0
    %164 = vmatprep.subr.mxu0 0.0
    %165 = vmatpush1.msra.mxu0 0.0
    %166 = vmatprep.subr.mxu0 0.0
    %167 = vmatpush1.msra.mxu0 0.0
    %168 = vmatprep.subr.mxu0 0.0
    %169 = vmatpush1.msra.mxu0 0.0
    %170 = vmatprep.subr.mxu0 0.0
    %171 = vmatpush1.msra.mxu0 0.0
    %172 = vmatprep.subr.mxu0 0.0
    %173 = vmatpush1.msra.mxu0 0.0
    %174 = vmatprep.subr.mxu0 0.0
    %175 = vmatpush1.msra.mxu0 0.0
    %176 = vmatprep.subr.mxu0 0.0
    %177 = vmatpush1.msra.mxu0 0.0
    %178 = vmatprep.subr.mxu0 0.0
    %179 = vmatpush1.msra.mxu0 0.0
    %180 = vmatprep.subr.mxu0 0.0
    %181 = vmatpush1.msra.mxu0 0.0
    %182 = vmatprep.subr.mxu0 0.0
    %183 = vmatpush1.msra.mxu0 0.0
    %184 = vmatprep.mubr.f32.mxu0 0.0
    %185 = vmatmul.mubr.f32.gmra.mrb[0].mxu0 %v118
    %v186 = vpop.f32.mrb[0].mxu0
    %v187 = vadd.f32 %v114, %v186
    %v188 = vpop.f32.mrb[0].mxu0
    %189 = vdwg.mxu0
    %190 = vst [vmem:[#allocation8] sm:$0x3] %v187
    // Predicated region
    $region26: #{tpu_custom_call.1} parent=1 // pred_check
      _
    $region27: #{tpu_custom_call.1} parent=1 // pred_check_branch
      %192 = sbr.rel (0) target = $region29
    $region28: #{tpu_custom_call.1} parent=1 // pred_region
      %s194 = ssub.s32 32, 32
      %195 = vsyncadd [#allocation5], %s194
      %s197 = sshll.u32 [#allocation8], 4
      %s198 = int_to_ptr.vmem [resolvable:$true] %s197
      %200 = dma.vmem_to_hbm [thread:$0]  %s198, 32, %s3, [#allocation5]
    $region29: #{tpu_custom_call.1} parent=1 // pred_fallthru
      _
    // Predicated region
    $region30: #{tpu_custom_call.1} parent=1 // pred_check
      _
    $region31: #{tpu_custom_call.1} parent=1 // pred_check_branch
      %202 = sbr.rel (0) target = $region33
    $region32: #{tpu_custom_call.1} parent=1 // pred_region
      %203 = dma.done [#allocation5], 32
    $region33: #{tpu_custom_call.1} parent=1 // pred_fallthru
      _
    %204 = vsyncpa [#allocation4], 1
    %205 = vsyncpa [#allocation7], 1
    %206 = vsyncpa [#allocation5], 1

</llo_original>
